<compile_context>
chip_gen: v5e
topology: v5e:2x2
jax: 0.10.0
libtpu: 0.0.40
codegen_flags: <defaults>
</compile_context>

<pallas_src>
import math
import functools

import jax
import jax.numpy as jnp
from jax.experimental import pallas as pl
from jax.experimental.pallas import tpu as pltpu


# ----------------------------------------------------------------------------
# Parameter / buffer construction (glue, plain JAX — deterministic, no files)
# ----------------------------------------------------------------------------
def make_positional_encoding(max_len: int, d_model: int) -> jnp.ndarray:
    """Builds pe with shape [max_len, d_model, 1], matching the torch buffer."""
    position = jnp.arange(max_len, dtype=jnp.float32)[:, None]            # [L, 1]
    div_term = jnp.exp(
        jnp.arange(0, d_model, 2, dtype=jnp.float32)
        * (-math.log(10000.0) / d_model)
    )                                                                      # [D/2]
    angles = position * div_term                                           # [L, D/2]
    pe = jnp.zeros((max_len, d_model), dtype=jnp.float32)
    pe = pe.at[:, 0::2].set(jnp.sin(angles))
    pe = pe.at[:, 1::2].set(jnp.cos(angles))
    return pe[:, :, None]                                                  # [L, D, 1]


# ----------------------------------------------------------------------------
# Kernels (operate on lane-dense [rows, D*W] blocks)
# ----------------------------------------------------------------------------
def _pe_add_kernel(x_ref, pe_ref, o_ref):
    # Eval path: pure streaming broadcast-add (dropout is identity).
    o_ref[...] = (x_ref[...] + pe_ref[...]).astype(o_ref.dtype)


def _pe_add_dropout_kernel(x_ref, pe_ref, noise_ref, o_ref, *,
                           keep_threshold: int, inv_keep: float):
    # noise_ref holds uniformly distributed int32 bits; a single signed compare
    # against a precomputed threshold implements "drop with prob p".
    y = x_ref[...] + pe_ref[...]
    keep = noise_ref[...] >= jnp.int32(keep_threshold)
    o_ref[...] = jnp.where(keep, y * jnp.float32(inv_keep),
                           jnp.float32(0.0)).astype(o_ref.dtype)


# ----------------------------------------------------------------------------
# Wrapper
# ----------------------------------------------------------------------------
def _pick_row_block(seq_len: int, flat_width: int, *,
                    bytes_per_elt: int = 4,
                    target_block_bytes: int = 512 * 1024) -> int:
    """Rows per grid step: ~0.5 MiB per block per array (safe on v5e/v6e/v7x)."""
    rows = max(1, target_block_bytes // (flat_width * bytes_per_elt))
    if rows >= seq_len:
        return seq_len                     # full extent: always a legal block dim
    return max(8, (rows // 8) * 8)         # keep sublane dim a multiple of 8


def positional_encoding_forward(
    x: jnp.ndarray,
    pe: jnp.ndarray,
    *,
    p: float = 0.1,
    train: bool = False,
    rng: jax.Array | None = None,
) -> jnp.ndarray:
    """x: [S, D, W], pe: [max_len, D, 1]. Returns x + pe[:S] (+ dropout if train)."""
    S, D, W = x.shape
    assert pe.shape[1] == D, "x.shape[1] must equal d_model (module broadcast rule)"
    DW = D * W

    # Free (contiguous) reshape to a lane-dense 2-D layout.
    x2 = x.reshape(S, DW)
    # Expand pe once in XLA to the same flat layout (pe[s, d] broadcast over w).
    pe2 = jnp.broadcast_to(pe[:S], (S, D, W)).reshape(S, DW)

    ts = _pick_row_block(S, DW)
    grid = (pl.cdiv(S, ts),)
    row_map = lambda i: (i, 0)
    tile_spec = pl.BlockSpec((ts, DW), row_map)
    cparams = pltpu.CompilerParams(dimension_semantics=("parallel",))

    if train and p > 0.0:
        assert rng is not None, "training-mode dropout needs an rng key"
        assert 0.0 < p < 1.0
        bits = jax.random.bits(rng, (S, DW), dtype=jnp.uint32)
        noise = jax.lax.bitcast_convert_type(bits, jnp.int32)     # uniform int32
        thr = int(round(p * (1 << 32))) - (1 << 31)               # P(noise < thr) = p
        thr = max(-(1 << 31), min(thr, (1 << 31) - 1))
        kernel = functools.partial(_pe_add_dropout_kernel,
                                   keep_threshold=thr,
                                   inv_keep=1.0 / (1.0 - p))
        out2 = pl.pallas_call(
            kernel,
            out_shape=jax.ShapeDtypeStruct((S, DW), x.dtype),
            grid=grid,
            in_specs=[tile_spec,
                      pl.BlockSpec((ts, DW), row_map),
                      pl.BlockSpec((ts, DW), row_map)],
            out_specs=pl.BlockSpec((ts, DW), row_map),
            compiler_params=cparams,
        )(x2, pe2, noise)
    else:
        out2 = pl.pallas_call(
            _pe_add_kernel,
            out_shape=jax.ShapeDtypeStruct((S, DW), x.dtype),
            grid=grid,
            in_specs=[tile_spec, pl.BlockSpec((ts, DW), row_map)],
            out_specs=pl.BlockSpec((ts, DW), row_map),
            compiler_params=cparams,
        )(x2, pe2)

    return out2.reshape(S, D, W)


# ----------------------------------------------------------------------------
# Demo / self-check
# ----------------------------------------------------------------------------
if __name__ == "__main__":
    key = jax.random.PRNGKey(0)
    kx, kdrop = jax.random.split(key)

    # Small shapes consistent with the module's broadcasting rules:
    # x: [seq_len=8, d_model=32, width=16]  (axis 1 must equal d_model)
    S, D, W = 8, 32, 16
    max_len = 64
    dropout_p = 0.1

    x = jax.random.normal(kx, (S, D, W), dtype=jnp.float32)
    pe = make_positional_encoding(max_len, D)
    ref = x + pe[:S]

    # Eval-mode forward (dropout = identity) — verify against pure-JAX reference.
    out_eval = jax.block_until_ready(
        positional_encoding_forward(x, pe, p=dropout_p, train=False))
    assert out_eval.shape == (S, D, W)
    assert jnp.allclose(out_eval, ref, atol=1e-6, rtol=1e-6), "eval-mode mismatch"

    # Training-mode forward — each element must be 0 or ref/(1-p).
    out_train = jax.block_until_ready(
        positional_encoding_forward(x, pe, p=dropout_p, train=True, rng=kdrop))
    assert out_train.shape == (S, D, W)
    scaled = ref / (1.0 - dropout_p)
    elementwise_ok = (out_train == 0.0) | jnp.isclose(out_train, scaled,
                                                      atol=1e-5, rtol=1e-5)
    assert bool(jnp.all(elementwise_ok)), "train-mode dropout semantics mismatch"
    drop_frac = float(jnp.mean(out_train == 0.0))
    assert 0.0 <= drop_frac < 0.5, f"implausible drop fraction {drop_frac}"

    print("KERNEL_OK")
</pallas_src>

<mosaic_0001>
module attributes {stable_mosaic.version = 11 : i64} {
  func.func @_pe_add_kernel(%arg0: i32, %arg1: memref<8x512xf32, #tpu.memory_space<vmem>>, %arg2: memref<8x512xf32, #tpu.memory_space<vmem>>, %arg3: memref<8x512xf32, #tpu.memory_space<vmem>>) attributes {dimension_semantics = [#tpu.dimension_semantics<parallel>], iteration_bounds = array<i64: 1>, scalar_prefetch = 0 : i64, scratch_operands = 0 : i64, tpu.core_type = #tpu.core_type<tc>, window_params = [{transform_indices = @transform_0, window_bounds = array<i64: 8, 512>}, {transform_indices = @transform_1, window_bounds = array<i64: 8, 512>}, {transform_indices = @transform_2, window_bounds = array<i64: 8, 512>}]} {
    %c0 = arith.constant 0 : index
    %c0_0 = arith.constant 0 : index
    %0 = vector.load %arg1[%c0, %c0_0] : memref<8x512xf32, #tpu.memory_space<vmem>>, vector<8x512xf32>
    %c0_1 = arith.constant 0 : index
    %c0_2 = arith.constant 0 : index
    %1 = vector.load %arg2[%c0_1, %c0_2] : memref<8x512xf32, #tpu.memory_space<vmem>>, vector<8x512xf32>
    %2 = arith.addf %0, %1 : vector<8x512xf32>
    %c0_3 = arith.constant 0 : index
    %c0_4 = arith.constant 0 : index
    %3 = vector.load %arg3[%c0_3, %c0_4] : memref<8x512xf32, #tpu.memory_space<vmem>>, vector<8x512xf32>
    tpu.vector_store %arg3[%c0_3, %c0_4], %2 {strides = array<i32>} : memref<8x512xf32, #tpu.memory_space<vmem>>, vector<8x512xf32>,
    return
  }
  func.func @transform_0(%arg0: i32) -> (i32, i32) {
    %c0_i32 = arith.constant 0 : i32
    %c0_i32_0 = arith.constant 0 : i32
    return %arg0, %c0_i32 : i32, i32
  }
  func.func @transform_1(%arg0: i32) -> (i32, i32) {
    %c0_i32 = arith.constant 0 : i32
    %c0_i32_0 = arith.constant 0 : i32
    return %arg0, %c0_i32 : i32, i32
  }
  func.func @transform_2(%arg0: i32) -> (i32, i32) {
    %c0_i32 = arith.constant 0 : i32
    %c0_i32_0 = arith.constant 0 : i32
    return %arg0, %c0_i32 : i32, i32
  }
}

</mosaic_0001>

<llo_original>
// kernel: tpu_custom_call.1
$region0: #{tpu_custom_call.1}
  #allocation0 [shape = 'u32[]', space=smem, size = 0x4, offset = 0x4, fixed_abs, tag = 'smem constant byte address 0x4 - core index']
  #allocation1 [shape = 'u32[72,128]{1,0:T(1,128)}', space=vmem, size = 0x9000, scoped, tag = 'internal scratch']
  %s0 = inlined_call_operand.hbm [shape: f32[8,512], index: 0, kind: input, shape index: {}]
  %s1 = inlined_call_operand.hbm [shape: f32[8,512], index: 1, kind: input, shape index: {}]
  %s2 = inlined_call_operand.hbm [shape: f32[8,512], index: 2, kind: output, shape index: {}]
  %s3 = sld [smem:[#allocation0]]
  $region26: #{tpu_custom_call.1} parent=0
    _
  %s5 = ssub.s32 1, %s3
  %s6 = scalar_select 0, %s5, %s3
  $region1: #{tpu_custom_call.1} parent=0
    #allocation2 [shape = 'u8[16384]{0}', space=vmem, size = 0x4000, scoped, tag = 'input window, operand 0, single buffered']
    #allocation3 [shape = 's32[1]{0}', space=sflag, size = 0x4, scoped, tag = 'scoped memory for tpu_custom_call.1']
    #allocation4 [shape = 's32[1]{0}', space=sflag, size = 0x4, scoped, tag = 'scoped memory for tpu_custom_call.1']
    #allocation5 [shape = 'u8[16384]{0}', space=vmem, size = 0x4000, scoped, tag = 'input window, operand 1, single buffered']
    #allocation6 [shape = 's32[1]{0}', space=sflag, size = 0x4, scoped, tag = 'scoped memory for tpu_custom_call.1']
    #allocation7 [shape = 'u8[16384]{0}', space=vmem, size = 0x4000, scoped, tag = 'output window, operand 0, single buffered']
    %7 = vsyncpa [#allocation3], 0
    %8 = vsyncpa [#allocation6], 0
    %9 = vsyncpa [#allocation4], 0
    // Predicated region
    $region2: #{tpu_custom_call.1} parent=1 // pred_check
      _
    $region3: #{tpu_custom_call.1} parent=1 // pred_check_branch
      %11 = sbr.rel (0) target = $region5
    $region4: #{tpu_custom_call.1} parent=1 // pred_region
      %13 = vsyncadd [#allocation3], 0
      %s15 = sshll.u32 %s0, 4
      %s16 = int_to_ptr.hbm [resolvable:$true] %s15
      %s17 = sshll.u32 [#allocation2], 4
      %s18 = int_to_ptr.vmem [resolvable:$true] %s17
      %20 = dma.hbm_to_vmem [thread:$0]  %s16, 512, %s18, [#allocation3]
    $region5: #{tpu_custom_call.1} parent=1 // pred_fallthru
      _
    // Predicated region
    $region6: #{tpu_custom_call.1} parent=1 // pred_check
      _
    $region7: #{tpu_custom_call.1} parent=1 // pred_check_branch
      %22 = sbr.rel (0) target = $region9
    $region8: #{tpu_custom_call.1} parent=1 // pred_region
      %24 = vsyncadd [#allocation6], 0
      %s26 = sshll.u32 %s1, 4
      %s27 = int_to_ptr.hbm [resolvable:$true] %s26
      %s28 = sshll.u32 [#allocation5], 4
      %s29 = int_to_ptr.vmem [resolvable:$true] %s28
      %31 = dma.hbm_to_vmem [thread:$0]  %s27, 512, %s29, [#allocation6]
    $region9: #{tpu_custom_call.1} parent=1 // pred_fallthru
      _
    // Predicated region
    $region10: #{tpu_custom_call.1} parent=1 // pred_check
      _
    $region11: #{tpu_custom_call.1} parent=1 // pred_check_branch
      %33 = sbr.rel (0) target = $region13
    $region12: #{tpu_custom_call.1} parent=1 // pred_region
      %35 = dma.done [#allocation3], 512
    $region13: #{tpu_custom_call.1} parent=1 // pred_fallthru
      _
    // Predicated region
    $region14: #{tpu_custom_call.1} parent=1 // pred_check
      _
    $region15: #{tpu_custom_call.1} parent=1 // pred_check_branch
      %37 = sbr.rel (0) target = $region17
    $region16: #{tpu_custom_call.1} parent=1 // pred_region
      %39 = dma.done [#allocation6], 512
    $region17: #{tpu_custom_call.1} parent=1 // pred_fallthru
      _
    %v40 = vld [vmem:[#allocation2] sm:$0xff]
    %v41 = vld [vmem:[#allocation2 + $0x8] sm:$0xff]
    %v42 = vld [vmem:[#allocation2 + $0x10] sm:$0xff]
    %v43 = vld [vmem:[#allocation2 + $0x18] sm:$0xff]
    %v44 = vld [vmem:[#allocation5] sm:$0xff]
    %v45 = vld [vmem:[#allocation5 + $0x8] sm:$0xff]
    %v46 = vld [vmem:[#allocation5 + $0x10] sm:$0xff]
    %v47 = vld [vmem:[#allocation5 + $0x18] sm:$0xff]
    %v48 = vadd.f32 %v40, %v44
    %v49 = vadd.f32 %v41, %v45
    %v50 = vadd.f32 %v42, %v46
    %v51 = vadd.f32 %v43, %v47
    %52 = vst [vmem:[#allocation7] sm:$0xff] %v48
    %53 = vst [vmem:[#allocation7 + $0x8] sm:$0xff] %v49
    %54 = vst [vmem:[#allocation7 + $0x10] sm:$0xff] %v50
    %55 = vst [vmem:[#allocation7 + $0x18] sm:$0xff] %v51
    // Predicated region
    $region18: #{tpu_custom_call.1} parent=1 // pred_check
      _
    $region19: #{tpu_custom_call.1} parent=1 // pred_check_branch
      %57 = sbr.rel (0) target = $region21
    $region20: #{tpu_custom_call.1} parent=1 // pred_region
      %59 = vsyncadd [#allocation4], 0
      %s61 = sshll.u32 [#allocation7], 4
      %s62 = int_to_ptr.vmem [resolvable:$true] %s61
      %s63 = sshll.u32 %s2, 4
      %s64 = int_to_ptr.hbm [resolvable:$true] %s63
      %66 = dma.vmem_to_hbm [thread:$0]  %s62, 512, %s64, [#allocation4]
    $region21: #{tpu_custom_call.1} parent=1 // pred_fallthru
      _
    // Predicated region
    $region22: #{tpu_custom_call.1} parent=1 // pred_check
      _
    $region23: #{tpu_custom_call.1} parent=1 // pred_check_branch
      %68 = sbr.rel (0) target = $region25
    $region24: #{tpu_custom_call.1} parent=1 // pred_region
      %70 = dma.done [#allocation4], 512
    $region25: #{tpu_custom_call.1} parent=1 // pred_fallthru
      _
    %71 = vsyncpa [#allocation3], 1
    %72 = vsyncpa [#allocation6], 1
    %73 = vsyncpa [#allocation4], 1

</llo_original>
